<compile_context>
chip_gen: v6e
topology: v6e:2x2x1
jax: 0.10.0
libtpu: 0.0.40
codegen_flags: <defaults>
</compile_context>

<pallas_src>
import functools

import jax
import jax.numpy as jnp
from jax import lax
from jax.experimental import pallas as pl
from jax.experimental.pallas import tpu as pltpu


def _round_up(x: int, m: int) -> int:
    return ((x + m - 1) // m) * m


def dynammo_forward_kernel(valid_len_ref, dyn_obs_ref, leig_ref, eig_col_ref,
                           stat_obs_ref, pi_col_ref, out_ref,
                           *, n_dyn, n_stat, t_pad, time_scale):
    n_eig = eig_col_ref.shape[0]
    n_states = pi_col_ref.shape[0]
    out_rows = out_ref.shape[0]

    # ---- dynamic experiments: correlation-function predictions (MXU) ---------
    # amplitudes_ik = <o_i, l_k>  -> (n_dyn, n_eig)
    amps = jnp.dot(dyn_obs_ref[...], leig_ref[...],
                   preferred_element_type=jnp.float32)
    amps2 = amps * amps

    # lag-time grid built in-kernel (iota is free): t * lag * dt_traj
    times_row = lax.broadcasted_iota(jnp.int32, (1, t_pad), 1).astype(jnp.float32)
    times_row = times_row * jnp.float32(time_scale)

    # lambda_k^t = exp(t * log(lambda_k)), built directly lane-dense (n_eig, t_pad).
    # TODO(synk): clamp before log drops the sign of zero/negative eigenvalues
    # (possible for reversible/ill-conditioned MSMs); torch's lambda**t would
    # alternate sign for integer t there. Also f32 vs torch f64 precision.
    log_eig = jnp.log(jnp.maximum(eig_col_ref[...], jnp.float32(1e-30)))  # (n_eig, 1)
    eig_pow = jnp.exp(log_eig * times_row)                                # (n_eig, t_pad)

    # pred_i(t) = sum_k amps2[i,k] * lambda_k^t   -> (n_dyn, t_pad)
    pred = jnp.dot(amps2, eig_pow, preferred_element_type=jnp.float32)

    # validity mask rebuilt from SMEM lengths (replaces the HBM mask DMA)
    row_ids = lax.broadcasted_iota(jnp.int32, (n_dyn, t_pad), 0)
    col_ids = lax.broadcasted_iota(jnp.int32, (n_dyn, t_pad), 1)
    len_b = jnp.zeros((n_dyn, t_pad), jnp.int32)
    for i in range(n_dyn):                      # static unroll, n_dyn is tiny
        len_b = jnp.where(row_ids == i, valid_len_ref[i], len_b)
    mask = col_ids < len_b

    # scatter: valid positions get the prediction, padding stays NaN
    out_ref[0:n_dyn, :] = jnp.where(mask, pred, jnp.float32(jnp.nan))

    # ---- static experiments: <s_j, pi>, lane-broadcast -> full-lane rows -----
    pi_b = jnp.broadcast_to(pi_col_ref[...], (n_states, t_pad))
    stat_b = jnp.dot(stat_obs_ref[...], pi_b,
                     preferred_element_type=jnp.float32)          # (n_stat, t_pad)
    out_ref[n_dyn:n_dyn + n_stat, :] = stat_b

    # deterministic NaN fill of the spare sublane-padding rows
    if out_rows > n_dyn + n_stat:
        out_ref[n_dyn + n_stat:, :] = jnp.full(
            (out_rows - n_dyn - n_stat, t_pad), jnp.nan, dtype=jnp.float32)


def dynammo_forward(dyn_obs, leigvecs, eigvals, valid_len, stat_obs, pi,
                    n_timepoints, *, lag=1, dt_traj=1.0):
    """
    dyn_obs   : (N_DYN, N_STATES)   dynamic observables by state
    leigvecs  : (N_STATES, N_EIG)   left eigenvectors
    eigvals   : (N_EIG,)            eigenvalues
    valid_len : (N_DYN,) int        number of valid (non-NaN-padded) time points
    stat_obs  : (N_STAT, N_STATES)  static observables by state
    pi        : (N_STATES,)         stationary distribution
    n_timepoints : int              padded number of lag-time points T

    Returns (dyn_pred (N_DYN, T) with NaN at padded positions,
             stat_pred (N_STAT, 1)).
    """
    n_dyn, n_states = dyn_obs.shape
    n_eig = leigvecs.shape[1]
    n_stat = stat_obs.shape[0]
    t = int(n_timepoints)

    t_pad = _round_up(max(t, 1), 128)          # lane-dense output store
    out_rows = _round_up(n_dyn + n_stat, 8)    # full sublane tiles for the slab

    # astype is a no-op (no HLO) when inputs are already f32; the (N,)->(N,1)
    # reshapes are layout bitcasts. allow_input_fusion below lets XLA fold any
    # residual producer ops into the pallas custom-call operands.
    dyn_obs_f = dyn_obs.astype(jnp.float32)
    leig_f = leigvecs.astype(jnp.float32)
    eig_col = eigvals.astype(jnp.float32).reshape(n_eig, 1)
    stat_obs_f = stat_obs.astype(jnp.float32)
    pi_col = pi.astype(jnp.float32).reshape(n_states, 1)
    valid_len_i = valid_len.astype(jnp.int32)

    kern = functools.partial(
        dynammo_forward_kernel,
        n_dyn=n_dyn, n_stat=n_stat, t_pad=t_pad,
        time_scale=float(lag) * float(dt_traj))

    flops = 2 * (n_dyn * n_states * n_eig
                 + n_dyn * n_eig * t_pad
                 + n_stat * n_states * t_pad)
    transcendentals = n_eig * (t_pad + 1)                       # log + exp
    bytes_accessed = 4 * (n_dyn * n_states + n_states * n_eig + n_eig
                          + n_stat * n_states + n_states + n_dyn
                          + out_rows * t_pad)

    out = pl.pallas_call(
        kern,
        out_shape=jax.ShapeDtypeStruct((out_rows, t_pad), jnp.float32),
        # No grid: single invocation, everything resident in VMEM (few KB).
        in_specs=[
            pl.BlockSpec(memory_space=pltpu.MemorySpace.SMEM),   # valid_len
            pl.BlockSpec(memory_space=pltpu.MemorySpace.VMEM),   # dyn_obs
            pl.BlockSpec(memory_space=pltpu.MemorySpace.VMEM),   # leigvecs
            pl.BlockSpec(memory_space=pltpu.MemorySpace.VMEM),   # eigvals column
            pl.BlockSpec(memory_space=pltpu.MemorySpace.VMEM),   # stat_obs
            pl.BlockSpec(memory_space=pltpu.MemorySpace.VMEM),   # pi column
        ],
        out_specs=pl.BlockSpec(memory_space=pltpu.MemorySpace.VMEM),
        compiler_params=pltpu.CompilerParams(
            allow_input_fusion=[True] * 6),
        cost_estimate=pl.CostEstimate(flops=flops,
                                      transcendentals=transcendentals,
                                      bytes_accessed=bytes_accessed),
    )(valid_len_i, dyn_obs_f, leig_f, eig_col, stat_obs_f, pi_col)

    dyn_pred = out[:n_dyn, :t]                        # NaN at padded positions
    stat_pred = out[n_dyn:n_dyn + n_stat, 0:1]        # (N_STAT, 1)
    return dyn_pred, stat_pred


if __name__ == "__main__":
    # ---- small deterministic synthetic "MSM + experiments" setup ----
    N_STATES = 32
    N_EIG = 8
    N_DYN = 4       # number of DynamicExperiment observables
    N_STAT = 2      # number of StaticExperiment observables
    T_MAX = 16      # padded number of lag-time points per dynamic experiment
    LAG = 1
    DT_TRAJ = 1.0

    key = jax.random.PRNGKey(0)
    k1, k2, k3, k4 = jax.random.split(key, 4)

    # stationary distribution pi and eigen-decomposition surrogates
    pi = jax.nn.softmax(jax.random.normal(k1, (N_STATES,), dtype=jnp.float32))
    reigvecs = jax.random.normal(k2, (N_STATES, N_EIG), dtype=jnp.float32)
    reigvecs = reigvecs.at[:, 0].set(1.0)                      # first right eigvec = 1
    leigvecs = pi[:, None] * reigvecs                          # l_k = diag(pi) r_k
    eigvals = jnp.concatenate(
        [jnp.ones((1,), jnp.float32),
         jnp.exp(-jnp.arange(1, N_EIG, dtype=jnp.float32) / 3.0)]
    )                                                          # 1 > lambda_1 > ... > 0

    # observables-by-state for each experiment
    dyn_obs = jax.random.normal(k3, (N_DYN, N_STATES), dtype=jnp.float32)
    stat_obs = jax.random.uniform(k4, (N_STAT, N_STATES), dtype=jnp.float32)

    # per-experiment number of valid time points (experiment i has T_MAX - 2*i)
    valid_len = jnp.array([T_MAX - 2 * i for i in range(N_DYN)], dtype=jnp.int32)

    # deterministic parameter init mirroring __init__ (used by loss(), not forward()):
    a_param = jnp.ones((N_DYN,), jnp.float32)
    b_param = jnp.zeros((N_DYN,), jnp.float32)
    # TODO(synk): nu/xi/phi/tau/chi, the static-AMM fitting loop and the Lagrange
    # loss terms belong to loss()/single_losses(), not forward(); not lowered here.

    dyn_pred, stat_pred = dynammo_forward(
        dyn_obs, leigvecs, eigvals, valid_len, stat_obs, pi, T_MAX,
        lag=LAG, dt_traj=DT_TRAJ)
    jax.block_until_ready((dyn_pred, stat_pred))

    # quick sanity check against a pure-JAX reference
    times = jnp.arange(T_MAX, dtype=jnp.float32) * LAG * DT_TRAJ
    mask = jnp.arange(T_MAX)[None, :] < valid_len[:, None]     # bool (N_DYN, T_MAX)
    amps2 = (dyn_obs @ leigvecs) ** 2
    eig_pow = eigvals[None, :] ** times[:, None]               # (T, N_EIG)
    ref_dyn = jnp.where(mask, amps2 @ eig_pow.T, jnp.nan)
    ref_stat = stat_obs @ pi.reshape(N_STATES, 1)

    assert dyn_pred.shape == (N_DYN, T_MAX) and stat_pred.shape == (N_STAT, 1)
    assert jnp.allclose(jnp.nan_to_num(dyn_pred), jnp.nan_to_num(ref_dyn),
                        rtol=1e-5, atol=1e-5)
    assert jnp.allclose(stat_pred, ref_stat, rtol=1e-5, atol=1e-5)
    assert bool(jnp.isnan(dyn_pred[-1, -1]))                   # padding stayed NaN
    assert int(jnp.isnan(dyn_pred).sum()) == int((~mask).sum())

    print("KERNEL_OK")
</pallas_src>

<mosaic_0001>
module attributes {stable_mosaic.version = 11 : i64} {
  func.func @dynammo_forward_kernel(%arg0: memref<4xi32, #tpu.memory_space<smem>>, %arg1: memref<4x32xf32, #tpu.memory_space<vmem>>, %arg2: memref<32x8xf32, #tpu.memory_space<vmem>>, %arg3: memref<8x1xf32, #tpu.memory_space<vmem>>, %arg4: memref<2x32xf32, #tpu.memory_space<vmem>>, %arg5: memref<32x1xf32, #tpu.memory_space<vmem>>, %arg6: memref<8x128xf32, #tpu.memory_space<vmem>>) attributes {dimension_semantics = [], scalar_prefetch = 0 : i64, scratch_operands = 0 : i64, tpu.core_type = #tpu.core_type<tc>} {
    %c0 = arith.constant 0 : index
    %c0_0 = arith.constant 0 : index
    %0 = vector.load %arg1[%c0, %c0_0] : memref<4x32xf32, #tpu.memory_space<vmem>>, vector<4x32xf32>
    %c0_1 = arith.constant 0 : index
    %c0_2 = arith.constant 0 : index
    %1 = vector.load %arg2[%c0_1, %c0_2] : memref<32x8xf32, #tpu.memory_space<vmem>>, vector<32x8xf32>
    %cst = arith.constant dense<0.000000e+00> : vector<4x8xf32>
    %2 = tpu.matmul %0, %1, %cst {dimension_numbers = #tpu.dot_dimension_numbers<[1], [0], [0], [1], [0, 0, 1, 1], [], []>} : vector<4x32xf32>, vector<32x8xf32>, vector<4x8xf32> -> vector<4x8xf32>
    %3 = arith.mulf %2, %2 : vector<4x8xf32>
    %4 = tpu.iota {dimensions = array<i32: 1>} : vector<1x128xi32>
    %5 = arith.sitofp %4 : vector<1x128xi32> to vector<1x128xf32>
    %cst_3 = arith.constant 1.000000e+00 : f32
    %6 = vector.broadcast %cst_3 : f32 to vector<1x128xf32>
    %7 = arith.mulf %5, %6 : vector<1x128xf32>
    %c0_4 = arith.constant 0 : index
    %c0_5 = arith.constant 0 : index
    %8 = vector.load %arg3[%c0_4, %c0_5] : memref<8x1xf32, #tpu.memory_space<vmem>>, vector<8x1xf32>
    %cst_6 = arith.constant 1.000000e-30 : f32
    %9 = vector.broadcast %cst_6 : f32 to vector<8x1xf32>
    %10 = arith.maximumf %8, %9 : vector<8x1xf32>
    %11 = math.log %10 : vector<8x1xf32>
    %12 = vector.broadcast %11 : vector<8x1xf32> to vector<8x128xf32>
    %13 = vector.broadcast %7 : vector<1x128xf32> to vector<8x128xf32>
    %14 = arith.mulf %12, %13 : vector<8x128xf32>
    %15 = math.exp %14 : vector<8x128xf32>
    %cst_7 = arith.constant dense<0.000000e+00> : vector<4x128xf32>
    %16 = tpu.matmul %3, %15, %cst_7 {dimension_numbers = #tpu.dot_dimension_numbers<[1], [0], [0], [1], [0, 0, 1, 1], [], []>} : vector<4x8xf32>, vector<8x128xf32>, vector<4x128xf32> -> vector<4x128xf32>
    %17 = tpu.iota {dimensions = array<i32: 0>} : vector<4x128xi32>
    %18 = tpu.iota {dimensions = array<i32: 1>} : vector<4x128xi32>
    %c0_i32 = arith.constant 0 : i32
    %19 = vector.broadcast %c0_i32 : i32 to vector<4x128xi32>
    %c0_i32_8 = arith.constant 0 : i32
    %20 = vector.broadcast %c0_i32_8 : i32 to vector<4x128xi32>
    %21 = arith.cmpi eq, %17, %20 : vector<4x128xi32>
    %c0_9 = arith.constant 0 : index
    %22 = memref.load %arg0[%c0_9] : memref<4xi32, #tpu.memory_space<smem>>
    %23 = vector.broadcast %22 : i32 to vector<4x128xi32>
    %24 = arith.select %21, %23, %19 : vector<4x128xi1>, vector<4x128xi32>
    %c1_i32 = arith.constant 1 : i32
    %25 = vector.broadcast %c1_i32 : i32 to vector<4x128xi32>
    %26 = arith.cmpi eq, %17, %25 : vector<4x128xi32>
    %c1 = arith.constant 1 : index
    %27 = memref.load %arg0[%c1] : memref<4xi32, #tpu.memory_space<smem>>
    %28 = vector.broadcast %27 : i32 to vector<4x128xi32>
    %29 = arith.select %26, %28, %24 : vector<4x128xi1>, vector<4x128xi32>
    %c2_i32 = arith.constant 2 : i32
    %30 = vector.broadcast %c2_i32 : i32 to vector<4x128xi32>
    %31 = arith.cmpi eq, %17, %30 : vector<4x128xi32>
    %c2 = arith.constant 2 : index
    %32 = memref.load %arg0[%c2] : memref<4xi32, #tpu.memory_space<smem>>
    %33 = vector.broadcast %32 : i32 to vector<4x128xi32>
    %34 = arith.select %31, %33, %29 : vector<4x128xi1>, vector<4x128xi32>
    %c3_i32 = arith.constant 3 : i32
    %35 = vector.broadcast %c3_i32 : i32 to vector<4x128xi32>
    %36 = arith.cmpi eq, %17, %35 : vector<4x128xi32>
    %c3 = arith.constant 3 : index
    %37 = memref.load %arg0[%c3] : memref<4xi32, #tpu.memory_space<smem>>
    %38 = vector.broadcast %37 : i32 to vector<4x128xi32>
    %39 = arith.select %36, %38, %34 : vector<4x128xi1>, vector<4x128xi32>
    %40 = arith.cmpi slt, %18, %39 : vector<4x128xi32>
    %cst_10 = arith.constant 0x7FC00000 : f32
    %41 = vector.broadcast %cst_10 : f32 to vector<4x128xf32>
    %42 = arith.select %40, %16, %41 : vector<4x128xi1>, vector<4x128xf32>
    %c0_11 = arith.constant 0 : index
    %c0_12 = arith.constant 0 : index
    %43 = vector.load %arg6[%c0_11, %c0_12] : memref<8x128xf32, #tpu.memory_space<vmem>>, vector<4x128xf32>
    tpu.vector_store %arg6[%c0_11, %c0_12], %42 {strides = array<i32>} : memref<8x128xf32, #tpu.memory_space<vmem>>, vector<4x128xf32>,
    %c0_13 = arith.constant 0 : index
    %c0_14 = arith.constant 0 : index
    %44 = vector.load %arg5[%c0_13, %c0_14] : memref<32x1xf32, #tpu.memory_space<vmem>>, vector<32x1xf32>
    %45 = vector.shape_cast %44 : vector<32x1xf32> to vector<32x1xf32>
    %46 = vector.broadcast %45 : vector<32x1xf32> to vector<32x128xf32>
    %c0_15 = arith.constant 0 : index
    %c0_16 = arith.constant 0 : index
    %47 = vector.load %arg4[%c0_15, %c0_16] : memref<2x32xf32, #tpu.memory_space<vmem>>, vector<2x32xf32>
    %cst_17 = arith.constant dense<0.000000e+00> : vector<2x128xf32>
    %48 = tpu.matmul %47, %46, %cst_17 {dimension_numbers = #tpu.dot_dimension_numbers<[1], [0], [0], [1], [0, 0, 1, 1], [], []>} : vector<2x32xf32>, vector<32x128xf32>, vector<2x128xf32> -> vector<2x128xf32>
    %c4 = arith.constant 4 : index
    %c0_18 = arith.constant 0 : index
    %49 = vector.load %arg6[%c4, %c0_18] : memref<8x128xf32, #tpu.memory_space<vmem>>, vector<2x128xf32>
    tpu.vector_store %arg6[%c4, %c0_18], %48 {strides = array<i32>} : memref<8x128xf32, #tpu.memory_space<vmem>>, vector<2x128xf32>,
    %cst_19 = arith.constant 0x7FC00000 : f32
    %50 = vector.broadcast %cst_19 : f32 to vector<2x128xf32>
    %c6 = arith.constant 6 : index
    %c0_20 = arith.constant 0 : index
    %51 = vector.load %arg6[%c6, %c0_20] : memref<8x128xf32, #tpu.memory_space<vmem>>, vector<2x128xf32>
    tpu.vector_store %arg6[%c6, %c0_20], %50 {strides = array<i32>} : memref<8x128xf32, #tpu.memory_space<vmem>>, vector<2x128xf32>,
    return
  }
}

</mosaic_0001>

<llo_original>
// kernel: tpu_custom_call.1
$region0: #{tpu_custom_call.1}
  #allocation0 [shape = 'u32[]', space=smem, size = 0x4, offset = 0x4, fixed_abs, tag = 'smem constant byte address 0x4 - core index']
  #allocation1 [shape = 'u32[144,128]{1,0:T(1,128)}', space=vmem, size = 0x12000, scoped, tag = 'internal scratch']
  %s0 = inlined_call_operand.vmem [shape: s32[4], index: 0, kind: input, shape index: {}]
  %s1 = inlined_call_operand.vmem [shape: f32[4,32], index: 1, kind: input, shape index: {}]
  %s2 = inlined_call_operand.vmem [shape: f32[32,8], index: 2, kind: input, shape index: {}]
  %s3 = inlined_call_operand.vmem [shape: f32[8,1], index: 3, kind: input, shape index: {}]
  %s4 = inlined_call_operand.vmem [shape: f32[2,32], index: 4, kind: input, shape index: {}]
  %s5 = inlined_call_operand.vmem [shape: f32[32,1], index: 5, kind: input, shape index: {}]
  %s6 = inlined_call_operand.hbm [shape: f32[8,128], index: 6, kind: output, shape index: {}]
  %s7 = sld [smem:[#allocation0]]
  $region38: #{tpu_custom_call.1} parent=0
    _
  %s9 = ssub.s32 1, %s7
  %s10 = scalar_select 0, %s9, %s7
  $region1: #{tpu_custom_call.1} parent=0
    #allocation2 [shape = 'u8[512]{0}', space=smem, size = 0x200, scoped, tag = 'input window, operand 0, single buffered']
    #allocation3 [shape = 's32[1]{0}', space=sflag, size = 0x4, scoped, tag = 'scoped memory for tpu_custom_call.1']
    #allocation4 [shape = 's32[1]{0}', space=sflag, size = 0x4, scoped, tag = 'scoped memory for tpu_custom_call.1']
    #allocation5 [shape = 'u8[4096]{0}', space=vmem, size = 0x1000, scoped, tag = 'output window, operand 0, single buffered']
    %11 = vsyncpa [#allocation4], 0
    %12 = vsyncpa [#allocation3], 0
    // Predicated region
    $region2: #{tpu_custom_call.1} parent=1 // pred_check
      _
    $region3: #{tpu_custom_call.1} parent=1 // pred_check_branch
      %14 = sbr.rel (0) target = $region5
    $region4: #{tpu_custom_call.1} parent=1 // pred_region
      %s16 = ssub.s32 16, 16
      %17 = vsyncadd [#allocation4], %s16
      %s19 = sshll.u32 %s0, 4
      %s20 = int_to_ptr.vmem [resolvable:$true] %s19
      %22 = dma.vmem_to_smem %s20, 16, [#allocation2], [#allocation4]
    $region5: #{tpu_custom_call.1} parent=1 // pred_fallthru
      _
    // Predicated region
    $region6: #{tpu_custom_call.1} parent=1 // pred_check
      _
    $region7: #{tpu_custom_call.1} parent=1 // pred_check_branch
      %24 = sbr.rel (0) target = $region9
    $region8: #{tpu_custom_call.1} parent=1 // pred_region
      _
    $region9: #{tpu_custom_call.1} parent=1 // pred_fallthru
      _
    // Predicated region
    $region10: #{tpu_custom_call.1} parent=1 // pred_check
      _
    $region11: #{tpu_custom_call.1} parent=1 // pred_check_branch
      %26 = sbr.rel (0) target = $region13
    $region12: #{tpu_custom_call.1} parent=1 // pred_region
      _
    $region13: #{tpu_custom_call.1} parent=1 // pred_fallthru
      _
    // Predicated region
    $region14: #{tpu_custom_call.1} parent=1 // pred_check
      _
    $region15: #{tpu_custom_call.1} parent=1 // pred_check_branch
      %28 = sbr.rel (0) target = $region17
    $region16: #{tpu_custom_call.1} parent=1 // pred_region
      _
    $region17: #{tpu_custom_call.1} parent=1 // pred_fallthru
      _
    // Predicated region
    $region18: #{tpu_custom_call.1} parent=1 // pred_check
      _
    $region19: #{tpu_custom_call.1} parent=1 // pred_check_branch
      %30 = sbr.rel (0) target = $region21
    $region20: #{tpu_custom_call.1} parent=1 // pred_region
      _
    $region21: #{tpu_custom_call.1} parent=1 // pred_fallthru
      _
    // Predicated region
    $region22: #{tpu_custom_call.1} parent=1 // pred_check
      _
    $region23: #{tpu_custom_call.1} parent=1 // pred_check_branch
      %32 = sbr.rel (0) target = $region25
    $region24: #{tpu_custom_call.1} parent=1 // pred_region
      _
    $region25: #{tpu_custom_call.1} parent=1 // pred_fallthru
      _
    // Predicated region
    $region26: #{tpu_custom_call.1} parent=1 // pred_check
      _
    $region27: #{tpu_custom_call.1} parent=1 // pred_check_branch
      %34 = sbr.rel (0) target = $region29
    $region28: #{tpu_custom_call.1} parent=1 // pred_region
      %35 = dma.done [#allocation4], 16
    $region29: #{tpu_custom_call.1} parent=1 // pred_fallthru
      _
    %36 = sfence
    %v37 = vld [vmem:[%s1] sm:$0xf]
    %v38 = vld [vmem:[%s2] sm:$0xff]
    %v39 = vld [vmem:[%s2 + $0x8] sm:$0xff]
    %v40 = vld [vmem:[%s2 + $0x10] sm:$0xff]
    %v41 = vld [vmem:[%s2 + $0x18] sm:$0xff]
    %vm42 = vcmask 261120
    %v44 = vsel %vm42, %v37, 0
    %46 = vmatprep.subr.mxu0 0.0
    %47 = vmatpush1.msra.mxu0 0.0
    %48 = vmatprep.subr.mxu0 0.0
    %49 = vmatpush1.msra.mxu0 0.0
    %50 = vmatprep.subr.mxu0 0.0
    %51 = vmatpush1.msra.mxu0 0.0
    %52 = vmatprep.subr.mxu0 0.0
    %53 = vmatpush1.msra.mxu0 0.0
    %54 = vmatprep.subr.mxu0 0.0
    %55 = vmatpush1.msra.mxu0 0.0
    %56 = vmatprep.subr.mxu0 0.0
    %57 = vmatpush1.msra.mxu0 0.0
    %58 = vmatprep.subr.mxu0 0.0
    %59 = vmatpush1.msra.mxu0 0.0
    %60 = vmatprep.subr.mxu0 0.0
    %61 = vmatpush1.msra.mxu0 0.0
    %62 = vmatprep.subr.mxu0 0.0
    %63 = vmatpush1.msra.mxu0 0.0
    %64 = vmatprep.subr.mxu0 0.0
    %65 = vmatpush1.msra.mxu0 0.0
    %66 = vmatprep.subr.mxu0 0.0
    %67 = vmatpush1.msra.mxu0 0.0
    %68 = vmatprep.subr.mxu0 0.0
    %69 = vmatpush1.msra.mxu0 0.0
    %70 = vmatprep.subr.mxu0 0.0
    %71 = vmatpush1.msra.mxu0 %v41
    %72 = vmatprep.subr.mxu0 0.0
    %73 = vmatpush1.msra.mxu0 %v40
    %74 = vmatprep.subr.mxu0 0.0
    %75 = vmatpush1.msra.mxu0 %v39
    %76 = vmatprep.subr.mxu0 0.0
    %77 = vmatpush1.msra.mxu0 %v38
    %78 = vmatprep.subr.mxu0 0.0
    %79 = vmatpush2.msra.mxu0 0.0
    %80 = vmatprep.subr.mxu0 0.0
    %81 = vmatpush2.msra.mxu0 0.0
    %82 = vmatprep.subr.mxu0 0.0
    %83 = vmatpush2.msra.mxu0 0.0
    %84 = vmatprep.subr.mxu0 0.0
    %85 = vmatpush2.msra.mxu0 0.0
    %86 = vmatprep.subr.mxu0 0.0
    %87 = vmatpush2.msra.mxu0 0.0
    %88 = vmatprep.subr.mxu0 0.0
    %89 = vmatpush2.msra.mxu0 0.0
    %90 = vmatprep.subr.mxu0 0.0
    %91 = vmatpush2.msra.mxu0 0.0
    %92 = vmatprep.subr.mxu0 0.0
    %93 = vmatpush2.msra.mxu0 0.0
    %94 = vmatprep.subr.mxu0 0.0
    %95 = vmatpush2.msra.mxu0 0.0
    %96 = vmatprep.subr.mxu0 0.0
    %97 = vmatpush2.msra.mxu0 0.0
    %98 = vmatprep.subr.mxu0 0.0
    %99 = vmatpush2.msra.mxu0 0.0
    %100 = vmatprep.subr.mxu0 0.0
    %101 = vmatpush2.msra.mxu0 0.0
    %102 = vmatprep.subr.mxu0 0.0
    %103 = vmatpush2.msra.mxu0 0.0
    %104 = vmatprep.subr.mxu0 0.0
    %105 = vmatpush2.msra.mxu0 0.0
    %106 = vmatprep.subr.mxu0 0.0
    %107 = vmatpush2.msra.mxu0 0.0
    %108 = vmatprep.subr.mxu0 0.0
    %109 = vmatpush2.msra.mxu0 0.0
    %110 = vmatprep.mubr.f32.mxu0 0.0
    %111 = vmatmul.mubr.f32.gmra.mxu0 %v44
    %v112 = vpop.f32.mrf.mxu0
    %v113 = vadd.f32 0.0, %v112
    %v114 = vpop.f32.mrf.mxu0
    %115 = vdwg.mxu0
    %v116 = vmul.f32 %v113, %v113
    %v117 = vlaneseq
    %v118 = vand.u32 %v117, 127
    %v119 = vcvt.s32.f32 %v118
    %v120 = vld [vmem:[%s3] sm:$0xff]
    %v121 = vmax.f32 %v120, 1e-30
    %v122 = vlog2.pop %v121
    %v123 = vmul.f32 %v122, 0.6931472
    %125 = vset.pattern.permute.xlu0 0
    %126 = vperm.xlu0 %125, %v123
    %v127 = vpop.permute.xlu0 %126
    %v129 = vmul.f32 %v127, %v119
    %v130 = vmul.f32 %v129, 1.442695
    %v131 = vpow.pop %v130
    %vm132 = vcmask 64512
    %v134 = vsel %vm132, %v116, 0
    %136 = vmatprep.subr.mxu0 0.0
    %137 = vmatpush1.msra.mxu0 0.0
    %138 = vmatprep.subr.mxu0 0.0
    %139 = vmatpush1.msra.mxu0 0.0
    %140 = vmatprep.subr.mxu0 0.0
    %141 = vmatpush1.msra.mxu0 0.0
    %142 = vmatprep.subr.mxu0 0.0
    %143 = vmatpush1.msra.mxu0 0.0
    %144 = vmatprep.subr.mxu0 0.0
    %145 = vmatpush1.msra.mxu0 0.0
    %146 = vmatprep.subr.mxu0 0.0
    %147 = vmatpush1.msra.mxu0 0.0
    %148 = vmatprep.subr.mxu0 0.0
    %149 = vmatpush1.msra.mxu0 0.0
    %150 = vmatprep.subr.mxu0 0.0
    %151 = vmatpush1.msra.mxu0 0.0
    %152 = vmatprep.subr.mxu0 0.0
    %153 = vmatpush1.msra.mxu0 0.0
    %154 = vmatprep.subr.mxu0 0.0
    %155 = vmatpush1.msra.mxu0 0.0
    %156 = vmatprep.subr.mxu0 0.0
    %157 = vmatpush1.msra.mxu0 0.0
    %158 = vmatprep.subr.mxu0 0.0
    %159 = vmatpush1.msra.mxu0 0.0
    %160 = vmatprep.subr.mxu0 0.0
    %161 = vmatpush1.msra.mxu0 0.0
    %162 = vmatprep.subr.mxu0 0.0
    %163 = vmatpush1.msra.mxu0 0.0
    %164 = vmatprep.subr.mxu0 0.0
    %165 = vmatpush1.msra.mxu0 0.0
    %166 = vmatprep.subr.mxu0 0.0
    %167 = vmatpush1.msra.mxu0 %v131
    %168 = vmatprep.subr.mxu0 0.0
    %169 = vmatpush2.msra.mxu0 0.0
    %170 = vmatprep.subr.mxu0 0.0
    %171 = vmatpush2.msra.mxu0 0.0
    %172 = vmatprep.subr.mxu0 0.0
    %173 = vmatpush2.msra.mxu0 0.0
    %174 = vmatprep.subr.mxu0 0.0
    %175 = vmatpush2.msra.mxu0 0.0
    %176 = vmatprep.subr.mxu0 0.0
    %177 = vmatpush2.msra.mxu0 0.0
    %178 = vmatprep.subr.mxu0 0.0
    %179 = vmatpush2.msra.mxu0 0.0
    %180 = vmatprep.subr.mxu0 0.0
    %181 = vmatpush2.msra.mxu0 0.0
    %182 = vmatprep.subr.mxu0 0.0
    %183 = vmatpush2.msra.mxu0 0.0
    %184 = vmatprep.subr.mxu0 0.0
    %185 = vmatpush2.msra.mxu0 0.0
    %186 = vmatprep.subr.mxu0 0.0
    %187 = vmatpush2.msra.mxu0 0.0
    %188 = vmatprep.subr.mxu0 0.0
    %189 = vmatpush2.msra.mxu0 0.0
    %190 = vmatprep.subr.mxu0 0.0
    %191 = vmatpush2.msra.mxu0 0.0
    %192 = vmatprep.subr.mxu0 0.0
    %193 = vmatpush2.msra.mxu0 0.0
    %194 = vmatprep.subr.mxu0 0.0
    %195 = vmatpush2.msra.mxu0 0.0
    %196 = vmatprep.subr.mxu0 0.0
    %197 = vmatpush2.msra.mxu0 0.0
    %198 = vmatprep.subr.mxu0 0.0
    %199 = vmatpush2.msra.mxu0 0.0
    %200 = vmatprep.mubr.f32.mxu0 0.0
    %201 = vmatmul.mubr.f32.gmra.mxu0 %v134
    %v202 = vpop.f32.mrf.mxu0
    %v203 = vadd.f32 0.0, %v202
    %v204 = vpop.f32.mrf.mxu0
    %205 = vdwg.mxu0
    %v206 = vlaneseq
    %v207 = vshrl.u32 %v206, 7
    %vm208 = vcmp.eq.s32.totalorder %v207, 0
    %s209 = sld [smem:[#allocation2]]
    %v210 = vstv %s209
    %v211 = vsel %vm208, %v210, 0
    %vm212 = vcmp.eq.s32.totalorder %v207, 1
    %s213 = sld [smem:[#allocation2 + $0x1]]
    %v214 = vstv %s213
    %v215 = vsel %vm212, %v214, %v211
    %vm216 = vcmp.eq.s32.totalorder %v207, 2
    %s217 = sld [smem:[#allocation2 + $0x2]]
    %v218 = vstv %s217
    %v219 = vsel %vm216, %v218, %v215
    %vm220 = vcmp.eq.s32.totalorder %v207, 3
    %s221 = sld [smem:[#allocation2 + $0x3]]
    %v222 = vstv %s221
    %v223 = vsel %vm220, %v222, %v219
    %vm224 = vcmp.lt.s32.totalorder %v118, %v223
    %v225 = vsel %vm224, %v203, nan
    %226 = vst [vmem:[#allocation5] sm:$0xf] %v225
    %v227 = vld [vmem:[%s5] sm:$0xff]
    %v228 = vld [vmem:[%s5 + $0x8] sm:$0xff]
    %v229 = vld [vmem:[%s5 + $0x10] sm:$0xff]
    %v230 = vld [vmem:[%s5 + $0x18] sm:$0xff]
    %232 = vset.pattern.permute.xlu0 0
    %233 = vperm.xlu0 %232, %v227
    %v234 = vpop.permute.xlu0 %233
    %237 = vset.pattern.permute.xlu0 0
    %238 = vperm.xlu0 %237, %v228
    %v239 = vpop.permute.xlu0 %238
    %242 = vset.pattern.permute.xlu0 0
    %243 = vperm.xlu0 %242, %v229
    %v244 = vpop.permute.xlu0 %243
    %247 = vset.pattern.permute.xlu0 0
    %248 = vperm.xlu0 %247, %v230
    %v249 = vpop.permute.xlu0 %248
    %v251 = vld [vmem:[%s4] sm:$0x3]
    %v253 = vsel %vm42, %v251, 0
    %255 = vmatprep.subr.mxu0 0.0
    %256 = vmatpush1.msra.mxu0 0.0
    %257 = vmatprep.subr.mxu0 0.0
    %258 = vmatpush1.msra.mxu0 0.0
    %259 = vmatprep.subr.mxu0 0.0
    %260 = vmatpush1.msra.mxu0 0.0
    %261 = vmatprep.subr.mxu0 0.0
    %262 = vmatpush1.msra.mxu0 0.0
    %263 = vmatprep.subr.mxu0 0.0
    %264 = vmatpush1.msra.mxu0 0.0
    %265 = vmatprep.subr.mxu0 0.0
    %266 = vmatpush1.msra.mxu0 0.0
    %267 = vmatprep.subr.mxu0 0.0
    %268 = vmatpush1.msra.mxu0 0.0
    %269 = vmatprep.subr.mxu0 0.0
    %270 = vmatpush1.msra.mxu0 0.0
    %271 = vmatprep.subr.mxu0 0.0
    %272 = vmatpush1.msra.mxu0 0.0
    %273 = vmatprep.subr.mxu0 0.0
    %274 = vmatpush1.msra.mxu0 0.0
    %275 = vmatprep.subr.mxu0 0.0
    %276 = vmatpush1.msra.mxu0 0.0
    %277 = vmatprep.subr.mxu0 0.0
    %278 = vmatpush1.msra.mxu0 0.0
    %279 = vmatprep.subr.mxu0 0.0
    %280 = vmatpush1.msra.mxu0 %v249
    %281 = vmatprep.subr.mxu0 0.0
    %282 = vmatpush1.msra.mxu0 %v244
    %283 = vmatprep.subr.mxu0 0.0
    %284 = vmatpush1.msra.mxu0 %v239
    %285 = vmatprep.subr.mxu0 0.0
    %286 = vmatpush1.msra.mxu0 %v234
    %287 = vmatprep.subr.mxu0 0.0
    %288 = vmatpush2.msra.mxu0 0.0
    %289 = vmatprep.subr.mxu0 0.0
    %290 = vmatpush2.msra.mxu0 0.0
    %291 = vmatprep.subr.mxu0 0.0
    %292 = vmatpush2.msra.mxu0 0.0
    %293 = vmatprep.subr.mxu0 0.0
    %294 = vmatpush2.msra.mxu0 0.0
    %295 = vmatprep.subr.mxu0 0.0
    %296 = vmatpush2.msra.mxu0 0.0
    %297 = vmatprep.subr.mxu0 0.0
    %298 = vmatpush2.msra.mxu0 0.0
    %299 = vmatprep.subr.mxu0 0.0
    %300 = vmatpush2.msra.mxu0 0.0
    %301 = vmatprep.subr.mxu0 0.0
    %302 = vmatpush2.msra.mxu0 0.0
    %303 = vmatprep.subr.mxu0 0.0
    %304 = vmatpush2.msra.mxu0 0.0
    %305 = vmatprep.subr.mxu0 0.0
    %306 = vmatpush2.msra.mxu0 0.0
    %307 = vmatprep.subr.mxu0 0.0
    %308 = vmatpush2.msra.mxu0 0.0
    %309 = vmatprep.subr.mxu0 0.0
    %310 = vmatpush2.msra.mxu0 0.0
    %311 = vmatprep.subr.mxu0 0.0
    %312 = vmatpush2.msra.mxu0 0.0
    %313 = vmatprep.subr.mxu0 0.0
    %314 = vmatpush2.msra.mxu0 0.0
    %315 = vmatprep.subr.mxu0 0.0
    %316 = vmatpush2.msra.mxu0 0.0
    %317 = vmatprep.subr.mxu0 0.0
    %318 = vmatpush2.msra.mxu0 0.0
    %319 = vmatprep.mubr.f32.mxu0 0.0
    %320 = vmatmul.mubr.f32.gmra.mxu0 %v253
    %v321 = vpop.f32.mrf.mxu0
    %v322 = vadd.f32 0.0, %v321
    %v323 = vpop.f32.mrf.mxu0
    %324 = vdwg.mxu0
    %325 = vst [vmem:[#allocation5 + $0x4] sm:$0x3] %v322
    %326 = vst [vmem:[#allocation5 + $0x6] sm:$0x3] nan
    // Predicated region
    $region30: #{tpu_custom_call.1} parent=1 // pred_check
      _
    $region31: #{tpu_custom_call.1} parent=1 // pred_check_branch
      %328 = sbr.rel (0) target = $region33
    $region32: #{tpu_custom_call.1} parent=1 // pred_region
      %s330 = ssub.s32 128, 128
      %331 = vsyncadd [#allocation3], %s330
      %s333 = sshll.u32 [#allocation5], 4
      %s334 = int_to_ptr.vmem [resolvable:$true] %s333
      %336 = dma.vmem_to_hbm [thread:$0]  %s334, 128, %s6, [#allocation3]
    $region33: #{tpu_custom_call.1} parent=1 // pred_fallthru
      _
    // Predicated region
    $region34: #{tpu_custom_call.1} parent=1 // pred_check
      _
    $region35: #{tpu_custom_call.1} parent=1 // pred_check_branch
      %338 = sbr.rel (0) target = $region37
    $region36: #{tpu_custom_call.1} parent=1 // pred_region
      %339 = dma.done [#allocation3], 128
    $region37: #{tpu_custom_call.1} parent=1 // pred_fallthru
      _
    %340 = vsyncpa [#allocation3], 1
    %341 = vsyncpa [#allocation4], 1

</llo_original>
